<compile_context>
chip_gen: v6e
topology: v6e:2x2x1
jax: 0.10.0
libtpu: 0.0.40
codegen_flags: <defaults>
</compile_context>

<pallas_src>
import functools

import jax
import jax.numpy as jnp
from jax.experimental import pallas as pl
from jax.experimental.pallas import tpu as pltpu


def _round_up(x, m):
    return ((x + m - 1) // m) * m


def encoder_kernel(xa_ref, xh_ref, w1_ref, b1_ref, w2_ref, b2_ref, o_ref,
                   *, wp, ntile):
    """One grid step: P packed images x ntile flattened output positions.

    xa_ref: (1, P*Cin, ntile)     bf16  flattened padded input, tile t
    xh_ref: (1, P*Cin, halo)      bf16  halo that immediately follows tile t
    w1_ref: (P*C1, 9*P*Cin)       bf16  3x3 weights, block-packed over P images
    b1_ref: (P*C1, 1)             f32
    w2_ref: (P*C2, P*C1)          bf16  1x1 weights, block-diagonal over P images
    b2_ref: (P*C2, 1)             f32
    o_ref : (1, P*C2, ntile)      f32
    """
    xa = xa_ref[0]                                     # (P*Cin, ntile)
    xh = xh_ref[0]                                     # (P*Cin, halo)
    xcat = jnp.concatenate([xa, xh], axis=-1)          # (P*Cin, ntile + halo)

    # Build the im2col slab in VMEM: 9 lane-shifted copies stacked on sublanes.
    # Row order: tap-major (ky,kx), then (image, channel) -- matches w1_big.
    pieces = []
    for ky in range(3):
        for kx in range(3):
            off = ky * wp + kx                         # static tap offset
            pieces.append(xcat[:, off:off + ntile])
    slab = jnp.concatenate(pieces, axis=0)             # (9*P*Cin, ntile) bf16

    # conv1 (3x3) as ONE matmul, f32 accumulation, bias + ReLU in f32.
    h = jnp.dot(w1_ref[...], slab, preferred_element_type=jnp.float32)
    h = jnp.maximum(h + b1_ref[...], 0.0)
    h = h.astype(jnp.bfloat16)

    # conv2 (1x1) as one matmul.
    out = jnp.dot(w2_ref[...], h, preferred_element_type=jnp.float32) + b2_ref[...]
    o_ref[0] = out.astype(o_ref.dtype)


def encoder_forward(image, message, w1, b1, w2, b2, *,
                    pixel_tile=4096, max_pack=4, min_grid_steps=8):
    """image: (B,3,H,W), message: (B,1,H,W) -> (B,3,H,W) float32 (NCHW)."""
    combined = jnp.concatenate([image, message], axis=1)        # (B, Cin, H, W)
    B, Cin, H, W = combined.shape
    C1 = w1.shape[0]                                            # 64
    C2 = w2.shape[0]                                            # 3
    Hp, Wp = H + 2, W + 2

    # Images packed per MXU pass (4 fills the 256-wide MXU on v6e/v7x; pass
    # max_pack=2 on v5e's 128-wide MXU).
    pack = 1
    for p in (4, 2):
        if p <= max_pack and B % p == 0:
            pack = p
            break

    # ---- pixel tiling over flattened padded positions ----------------------
    # Output "base" index b = h*Wp + w; tap (ky,kx) reads flat index b+ky*Wp+kx.
    nout = H * Wp                                   # junk cols (w>=W) sliced later
    halo = _round_up(2 * Wp + 2, 128)               # max tap reach past the tile
    m = max(1, pixel_tile // halo)
    while m > 1 and (B // pack) * pl.cdiv(nout, m * halo) < min_grid_steps:
        m //= 2                                     # more grid steps for megacore
    ntile = m * halo                                # multiple of 128 and of halo
    n_tiles = pl.cdiv(nout, ntile)
    ratio = ntile // halo
    lpad = (n_tiles + 1) * ntile                    # evenly blocked + halo room

    # ---- padded, flattened, bf16 input: (B//P, P*Cin, lpad) -----------------
    xp = jnp.pad(combined.astype(jnp.bfloat16), ((0, 0), (0, 0), (1, 1), (1, 1)))
    xflat = xp.reshape(B, Cin, Hp * Wp)
    xflat = jnp.pad(xflat, ((0, 0), (0, 0), (0, lpad - Hp * Wp)))
    xflat = xflat.reshape(B // pack, pack * Cin, lpad)

    # ---- weights packed so P images share one MXU pass ----------------------
    eye = jnp.eye(pack, dtype=jnp.float32)
    w1_big = jnp.concatenate(
        [jnp.kron(eye, w1[:, :, ky, kx].astype(jnp.float32))
         for ky in range(3) for kx in range(3)], axis=1)        # (P*C1, 9*P*Cin)
    w2_big = jnp.kron(eye, w2.reshape(C2, C1).astype(jnp.float32))   # (P*C2, P*C1)
    b1_big = jnp.tile(b1.astype(jnp.float32), pack).reshape(pack * C1, 1)
    b2_big = jnp.tile(b2.astype(jnp.float32), pack).reshape(pack * C2, 1)
    w1_big = w1_big.astype(jnp.bfloat16)
    w2_big = w2_big.astype(jnp.bfloat16)

    kernel = functools.partial(encoder_kernel, wp=Wp, ntile=ntile)

    out_flat = pl.pallas_call(
        kernel,
        out_shape=jax.ShapeDtypeStruct((B // pack, pack * C2, n_tiles * ntile),
                                       jnp.float32),
        grid_spec=pltpu.PrefetchScalarGridSpec(
            num_scalar_prefetch=0,
            grid=(B // pack, n_tiles),
            in_specs=[
                # main tile and its trailing halo -- same array, two windows
                pl.BlockSpec((1, pack * Cin, ntile), lambda b, t: (b, 0, t)),
                pl.BlockSpec((1, pack * Cin, halo),
                             lambda b, t: (b, 0, (t + 1) * ratio)),
                pl.BlockSpec((pack * C1, 9 * pack * Cin), lambda b, t: (0, 0)),
                pl.BlockSpec((pack * C1, 1), lambda b, t: (0, 0)),
                pl.BlockSpec((pack * C2, pack * C1), lambda b, t: (0, 0)),
                pl.BlockSpec((pack * C2, 1), lambda b, t: (0, 0)),
            ],
            out_specs=pl.BlockSpec((1, pack * C2, ntile), lambda b, t: (b, 0, t)),
        ),
        compiler_params=pltpu.CompilerParams(
            dimension_semantics=("parallel", "parallel"),
            vmem_limit_bytes=32 * 1024 * 1024),
    )(xflat, xflat, w1_big, b1_big, w2_big, b2_big)

    # (B//P, P*C2, Npad) -> (B, C2, H, W): drop pad columns / rows, no transpose.
    out = out_flat.reshape(B, C2, n_tiles * ntile)[:, :, :H * Wp]
    out = out.reshape(B, C2, H, Wp)[:, :, :, :W]
    return out


def reference_forward(image, message, w1, b1, w2, b2):
    """Pure-JAX reference (lax conv) with PyTorch NCHW semantics, f32."""
    x = jnp.concatenate([image, message], axis=1)
    y = jax.lax.conv_general_dilated(
        x, w1, window_strides=(1, 1), padding=((1, 1), (1, 1)),
        dimension_numbers=("NCHW", "OIHW", "NCHW"))
    y = jnp.maximum(y + b1.reshape(1, -1, 1, 1), 0.0)
    z = jax.lax.conv_general_dilated(
        y, w2, window_strides=(1, 1), padding=((0, 0), (0, 0)),
        dimension_numbers=("NCHW", "OIHW", "NCHW"))
    return z + b2.reshape(1, -1, 1, 1)


if __name__ == "__main__":
    key = jax.random.PRNGKey(0)
    k_img, k_msg, k_w1, k_b1, k_w2, k_b2 = jax.random.split(key, 6)

    B, H, W = 2, 16, 16
    image = jax.random.normal(k_img, (B, 3, H, W), dtype=jnp.float32)
    message = jax.random.normal(k_msg, (B, 1, H, W), dtype=jnp.float32)

    # Shapes match nn.Conv2d(4, 64, 3, padding=1) / nn.Conv2d(64, 3, 1).
    w1 = 0.1 * jax.random.normal(k_w1, (64, 4, 3, 3), dtype=jnp.float32)
    b1 = 0.1 * jax.random.normal(k_b1, (64,), dtype=jnp.float32)
    w2 = 0.1 * jax.random.normal(k_w2, (3, 64, 1, 1), dtype=jnp.float32)
    b2 = 0.1 * jax.random.normal(k_b2, (3,), dtype=jnp.float32)

    out = encoder_forward(image, message, w1, b1, w2, b2)
    out = jax.block_until_ready(out)

    ref = reference_forward(image, message, w1, b1, w2, b2)
    assert out.shape == (B, 3, H, W)
    # bf16 input/weight stream (f32 accumulation) => ~1e-2-level deviations.
    assert jnp.allclose(out, ref, atol=3e-2, rtol=3e-2), "mismatch vs reference"

    print("KERNEL_OK")
</pallas_src>

<mosaic_0001>
module attributes {stable_mosaic.version = 11 : i64} {
  func.func @encoder_kernel(%arg0: i32, %arg1: i32, %arg2: memref<1x8x128xbf16, #tpu.memory_space<vmem>>, %arg3: memref<1x8x128xbf16, #tpu.memory_space<vmem>>, %arg4: memref<128x72xbf16, #tpu.memory_space<vmem>>, %arg5: memref<128x1xf32, #tpu.memory_space<vmem>>, %arg6: memref<6x128xbf16, #tpu.memory_space<vmem>>, %arg7: memref<6x1xf32, #tpu.memory_space<vmem>>, %arg8: memref<1x6x128xf32, #tpu.memory_space<vmem>>) attributes {dimension_semantics = [#tpu.dimension_semantics<parallel>, #tpu.dimension_semantics<parallel>], iteration_bounds = array<i64: 1, 3>, scalar_prefetch = 0 : i64, scratch_operands = 0 : i64, tpu.core_type = #tpu.core_type<tc>, window_params = [{transform_indices = @transform_0, window_bounds = array<i64: 1, 8, 128>}, {transform_indices = @transform_1, window_bounds = array<i64: 1, 8, 128>}, {pipeline_mode = #tpu.pipeline_mode<synchronous>, transform_indices = @transform_2, window_bounds = array<i64: 128, 72>}, {pipeline_mode = #tpu.pipeline_mode<synchronous>, transform_indices = @transform_3, window_bounds = array<i64: 128, 1>}, {pipeline_mode = #tpu.pipeline_mode<synchronous>, transform_indices = @transform_4, window_bounds = array<i64: 6, 128>}, {pipeline_mode = #tpu.pipeline_mode<synchronous>, transform_indices = @transform_5, window_bounds = array<i64: 6, 1>}, {transform_indices = @transform_6, window_bounds = array<i64: 1, 6, 128>}]} {
    %c0 = arith.constant 0 : index
    %c0_0 = arith.constant 0 : index
    %c0_1 = arith.constant 0 : index
    %0 = vector.load %arg2[%c0, %c0_0, %c0_1] : memref<1x8x128xbf16, #tpu.memory_space<vmem>>, vector<1x8x128xbf16>
    %1 = vector.shape_cast %0 : vector<1x8x128xbf16> to vector<8x128xbf16>
    %c0_2 = arith.constant 0 : index
    %c0_3 = arith.constant 0 : index
    %c0_4 = arith.constant 0 : index
    %2 = vector.load %arg3[%c0_2, %c0_3, %c0_4] : memref<1x8x128xbf16, #tpu.memory_space<vmem>>, vector<1x8x128xbf16>
    %3 = vector.shape_cast %2 : vector<1x8x128xbf16> to vector<8x128xbf16>
    %4 = tpu.concatenate %1, %3 in 1 : vector<8x128xbf16>, vector<8x128xbf16> -> vector<8x256xbf16>
    %5 = vector.extract_strided_slice %4 {offsets = [0, 0], sizes = [8, 128], strides = [1, 1]} : vector<8x256xbf16> to vector<8x128xbf16>
    %6 = vector.extract_strided_slice %4 {offsets = [0, 1], sizes = [8, 128], strides = [1, 1]} : vector<8x256xbf16> to vector<8x128xbf16>
    %7 = vector.extract_strided_slice %4 {offsets = [0, 2], sizes = [8, 128], strides = [1, 1]} : vector<8x256xbf16> to vector<8x128xbf16>
    %8 = vector.extract_strided_slice %4 {offsets = [0, 18], sizes = [8, 128], strides = [1, 1]} : vector<8x256xbf16> to vector<8x128xbf16>
    %9 = vector.extract_strided_slice %4 {offsets = [0, 19], sizes = [8, 128], strides = [1, 1]} : vector<8x256xbf16> to vector<8x128xbf16>
    %10 = vector.extract_strided_slice %4 {offsets = [0, 20], sizes = [8, 128], strides = [1, 1]} : vector<8x256xbf16> to vector<8x128xbf16>
    %11 = vector.extract_strided_slice %4 {offsets = [0, 36], sizes = [8, 128], strides = [1, 1]} : vector<8x256xbf16> to vector<8x128xbf16>
    %12 = vector.extract_strided_slice %4 {offsets = [0, 37], sizes = [8, 128], strides = [1, 1]} : vector<8x256xbf16> to vector<8x128xbf16>
    %13 = vector.extract_strided_slice %4 {offsets = [0, 38], sizes = [8, 128], strides = [1, 1]} : vector<8x256xbf16> to vector<8x128xbf16>
    %14 = tpu.concatenate %5, %6, %7, %8, %9, %10, %11, %12, %13 in 0 : vector<8x128xbf16>, vector<8x128xbf16>, vector<8x128xbf16>, vector<8x128xbf16>, vector<8x128xbf16>, vector<8x128xbf16>, vector<8x128xbf16>, vector<8x128xbf16>, vector<8x128xbf16> -> vector<72x128xbf16>
    %c0_5 = arith.constant 0 : index
    %c0_6 = arith.constant 0 : index
    %15 = vector.load %arg4[%c0_5, %c0_6] : memref<128x72xbf16, #tpu.memory_space<vmem>>, vector<128x72xbf16>
    %cst = arith.constant dense<0.000000e+00> : vector<128x128xf32>
    %16 = tpu.matmul %15, %14, %cst {dimension_numbers = #tpu.dot_dimension_numbers<[1], [0], [0], [1], [0, 0, 1, 1], [], []>} : vector<128x72xbf16>, vector<72x128xbf16>, vector<128x128xf32> -> vector<128x128xf32>
    %c0_7 = arith.constant 0 : index
    %c0_8 = arith.constant 0 : index
    %17 = vector.load %arg5[%c0_7, %c0_8] : memref<128x1xf32, #tpu.memory_space<vmem>>, vector<128x1xf32>
    %18 = vector.broadcast %17 : vector<128x1xf32> to vector<128x128xf32>
    %19 = arith.addf %16, %18 : vector<128x128xf32>
    %cst_9 = arith.constant 0.000000e+00 : f32
    %20 = vector.broadcast %cst_9 : f32 to vector<128x128xf32>
    %21 = arith.maximumf %19, %20 : vector<128x128xf32>
    %22 = arith.truncf %21 : vector<128x128xf32> to vector<128x128xbf16>
    %c0_10 = arith.constant 0 : index
    %c0_11 = arith.constant 0 : index
    %23 = vector.load %arg6[%c0_10, %c0_11] : memref<6x128xbf16, #tpu.memory_space<vmem>>, vector<6x128xbf16>
    %cst_12 = arith.constant dense<0.000000e+00> : vector<6x128xf32>
    %24 = tpu.matmul %23, %22, %cst_12 {dimension_numbers = #tpu.dot_dimension_numbers<[1], [0], [0], [1], [0, 0, 1, 1], [], []>} : vector<6x128xbf16>, vector<128x128xbf16>, vector<6x128xf32> -> vector<6x128xf32>
    %c0_13 = arith.constant 0 : index
    %c0_14 = arith.constant 0 : index
    %25 = vector.load %arg7[%c0_13, %c0_14] : memref<6x1xf32, #tpu.memory_space<vmem>>, vector<6x1xf32>
    %26 = vector.broadcast %25 : vector<6x1xf32> to vector<6x128xf32>
    %27 = arith.addf %24, %26 : vector<6x128xf32>
    %c0_15 = arith.constant 0 : index
    %c0_16 = arith.constant 0 : index
    %c0_17 = arith.constant 0 : index
    %28 = vector.load %arg8[%c0_15, %c0_16, %c0_17] : memref<1x6x128xf32, #tpu.memory_space<vmem>>, vector<1x6x128xf32>
    %29 = vector.shape_cast %28 : vector<1x6x128xf32> to vector<6x128xf32>
    %30 = vector.shape_cast %27 : vector<6x128xf32> to vector<1x6x128xf32>
    tpu.vector_store %arg8[%c0_15, %c0_16, %c0_17], %30 {strides = array<i32>} : memref<1x6x128xf32, #tpu.memory_space<vmem>>, vector<1x6x128xf32>,
    return
  }
  func.func @transform_0(%arg0: i32, %arg1: i32) -> (i32, i32, i32) {
    %c0_i32 = arith.constant 0 : i32
    %c0_i32_0 = arith.constant 0 : i32
    return %arg0, %c0_i32, %arg1 : i32, i32, i32
  }
  func.func @transform_1(%arg0: i32, %arg1: i32) -> (i32, i32, i32) {
    %c1_i32 = arith.constant 1 : i32
    %0 = arith.addi %arg1, %c1_i32 : i32
    %c1_i32_0 = arith.constant 1 : i32
    %1 = arith.muli %0, %c1_i32_0 : i32
    %c0_i32 = arith.constant 0 : i32
    %c0_i32_1 = arith.constant 0 : i32
    return %arg0, %c0_i32, %1 : i32, i32, i32
  }
  func.func @transform_2(%arg0: i32, %arg1: i32) -> (i32, i32) {
    %c0_i32 = arith.constant 0 : i32
    %c0_i32_0 = arith.constant 0 : i32
    %c0_i32_1 = arith.constant 0 : i32
    return %c0_i32, %c0_i32_0 : i32, i32
  }
  func.func @transform_3(%arg0: i32, %arg1: i32) -> (i32, i32) {
    %c0_i32 = arith.constant 0 : i32
    %c0_i32_0 = arith.constant 0 : i32
    %c0_i32_1 = arith.constant 0 : i32
    return %c0_i32, %c0_i32_0 : i32, i32
  }
  func.func @transform_4(%arg0: i32, %arg1: i32) -> (i32, i32) {
    %c0_i32 = arith.constant 0 : i32
    %c0_i32_0 = arith.constant 0 : i32
    %c0_i32_1 = arith.constant 0 : i32
    return %c0_i32, %c0_i32_0 : i32, i32
  }
  func.func @transform_5(%arg0: i32, %arg1: i32) -> (i32, i32) {
    %c0_i32 = arith.constant 0 : i32
    %c0_i32_0 = arith.constant 0 : i32
    %c0_i32_1 = arith.constant 0 : i32
    return %c0_i32, %c0_i32_0 : i32, i32
  }
  func.func @transform_6(%arg0: i32, %arg1: i32) -> (i32, i32, i32) {
    %c0_i32 = arith.constant 0 : i32
    %c0_i32_0 = arith.constant 0 : i32
    return %arg0, %c0_i32, %arg1 : i32, i32, i32
  }
}

</mosaic_0001>

<llo_original>
// kernel: tpu_custom_call.1
$region0: #{tpu_custom_call.1}
  #allocation0 [shape = 'u32[]', space=smem, size = 0x4, offset = 0x4, fixed_abs, tag = 'smem constant byte address 0x4 - core index']
  #allocation1 [shape = 'u32[144,128]{1,0:T(1,128)}', space=vmem, size = 0x12000, scoped, tag = 'internal scratch']
  %s0 = inlined_call_operand.vmem [shape: bf16[1,8,512], index: 0, kind: input, shape index: {}]
  %s1 = inlined_call_operand.vmem [shape: bf16[1,8,512], index: 1, kind: input, shape index: {}]
  %s2 = inlined_call_operand.vmem [shape: bf16[128,72], index: 2, kind: input, shape index: {}]
  %s3 = inlined_call_operand.vmem [shape: f32[128,1], index: 3, kind: input, shape index: {}]
  %s4 = inlined_call_operand.vmem [shape: bf16[6,128], index: 4, kind: input, shape index: {}]
  %s5 = inlined_call_operand.vmem [shape: f32[6,1], index: 5, kind: input, shape index: {}]
  %s6 = inlined_call_operand.vmem [shape: f32[1,6,384], index: 6, kind: output, shape index: {}]
  %s7 = sld [smem:[#allocation0]]
  $region57: #{tpu_custom_call.1} parent=0
    _
  %s9 = ssub.s32 1, %s7
  %s10 = scalar_select 0, %s9, %s7
  loop: start=0, step=1, limit=5
  $region2: #{tpu_custom_call.1} parent=0 // loop_pre_header
    _
  $region3: #{tpu_custom_call.1} parent=0 // loop_header
    %s12 = sphi 0, %s16
    %p13 = scmp.ge.s32.totalorder %s12, 5
    %s19 = sphi 0, %s31
    %s20 = sphi 0, %s27
    %s21 = sphi 0, %s19
    %s22 = sphi 0, %s20
    %s23 = sphi 0, %s21
    %s24 = sphi 0, %s22
    %s36 = sphi 0, %s38
    %s39 = sphi 0, %s36
    %s40 = sphi 0, %s39
    %s56 = sphi 0, %s40
    %s66 = sphi 0, %s68
    %s69 = sphi 0, %s66
    %s70 = sphi 0, %s69
    %s86 = sphi 0, %s70
    %s90 = sphi 0, %s90
    %s92 = sphi 0, %s90
    %s93 = sphi 0, %s92
    %s107 = sphi 0, %s93
    %s111 = sphi 0, %s111
    %s113 = sphi 0, %s111
    %s114 = sphi 0, %s113
    %s128 = sphi 0, %s114
    %s132 = sphi 0, %s132
    %s134 = sphi 0, %s132
    %s135 = sphi 0, %s134
    %s149 = sphi 0, %s135
    %s153 = sphi 0, %s153
    %s155 = sphi 0, %s153
    %s156 = sphi 0, %s155
    %s170 = sphi 0, %s156
    %s178 = sphi 0, %s180
    %s181 = sphi 0, %s178
    %s182 = sphi 0, %s181
    %s198 = sphi 0, %s182
  $region4: #{tpu_custom_call.1} parent=0 // loop_header_branch
    %15 = sbr.rel (%p13) target = $region8
  $region5: #{tpu_custom_call.1} parent=0 // loop_body
    %s17 = ssub.s32 %s12, 1
    %s18 = ssub.s32 %s12, 2
    %s25 = sadd.s32 1, %s20
    %p26 = scmp.ge.s32.totalorder %s25, 3
    %s27 = scalar_select %p26, 0, %s25
    %s28 = sadd.s32 1, %s19
    %s29 = scalar_select %p26, %s28, %s19
    %p30 = scmp.ge.s32.totalorder %s29, 1
    %s31 = scalar_select %p30, 0, %s29
    %s32 = ssub.s32 %s19, %s31
    %s33 = ssub.s32 %s20, %s27
    %s34 = sor.u32 %s32, %s33
    %p35 = scmp.eq.s32.totalorder %s34, 0
    %s37 = sadd.s32 %s36, 1
    %s38 = scalar_select %p35, %s36, %s37
    %p41 = pneg %p35
    %p42 = scmp.eq.s32.totalorder %s12, 2
    %p43 = por %p41, %p42
    %p44 = scmp.ne.s32.totalorder %s36, %s39
    %p45 = scmp.eq.s32.totalorder %s12, 0
    %p46 = por %p44, %p45
    %p47 = scmp.ne.s32.totalorder %s36, %s39
    %p48 = scmp.eq.s32.totalorder %s17, 2
    %p49 = por %p47, %p48
    %p50 = scmp.ne.s32.totalorder %s39, %s40
    %p51 = scmp.eq.s32.totalorder %s17, 0
    %p52 = por %p50, %p51
    %p53 = scmp.ne.s32.totalorder %s39, %s40
    %p54 = scmp.eq.s32.totalorder %s18, 2
    %p55 = por %p53, %p54
    %p57 = scmp.ne.s32.totalorder %s40, %s56
    %p58 = scmp.eq.s32.totalorder %s18, 0
    %p59 = por %p57, %p58
    %s60 = sadd.s32 %s20, 1
    %s61 = sadd.s32 %s27, 1
    %s62 = ssub.s32 %s19, %s31
    %s63 = ssub.s32 %s60, %s61
    %s64 = sor.u32 %s62, %s63
    %p65 = scmp.eq.s32.totalorder %s64, 0
    %s67 = sadd.s32 %s66, 1
    %s68 = scalar_select %p65, %s66, %s67
    %p71 = pneg %p65
    %p72 = scmp.eq.s32.totalorder %s12, 2
    %p73 = por %p71, %p72
    %p74 = scmp.ne.s32.totalorder %s66, %s69
    %p75 = scmp.eq.s32.totalorder %s12, 0
    %p76 = por %p74, %p75
    %p77 = scmp.ne.s32.totalorder %s66, %s69
    %p78 = scmp.eq.s32.totalorder %s17, 2
    %p79 = por %p77, %p78
    %p80 = scmp.ne.s32.totalorder %s69, %s70
    %p81 = scmp.eq.s32.totalorder %s17, 0
    %p82 = por %p80, %p81
    %p83 = scmp.ne.s32.totalorder %s69, %s70
    %p84 = scmp.eq.s32.totalorder %s18, 2
    %p85 = por %p83, %p84
    %p87 = scmp.ne.s32.totalorder %s70, %s86
    %p88 = scmp.eq.s32.totalorder %s18, 0
    %p89 = por %p87, %p88
    %s91 = sadd.s32 %s90, 1
    %p94 = scmp.eq.s32.totalorder %s12, 2
    %p95 = scmp.ne.s32.totalorder %s90, %s92
    %p96 = scmp.eq.s32.totalorder %s12, 0
    %p97 = por %p95, %p96
    %p98 = scmp.ne.s32.totalorder %s90, %s92
    %p99 = scmp.eq.s32.totalorder %s17, 2
    %p100 = por %p98, %p99
    %p101 = scmp.ne.s32.totalorder %s92, %s93
    %p102 = scmp.eq.s32.totalorder %s17, 0
    %p103 = por %p101, %p102
    %p104 = scmp.ne.s32.totalorder %s92, %s93
    %p105 = scmp.eq.s32.totalorder %s18, 2
    %p106 = por %p104, %p105
    %p108 = scmp.ne.s32.totalorder %s93, %s107
    %p109 = scmp.eq.s32.totalorder %s18, 0
    %p110 = por %p108, %p109
    %s112 = sadd.s32 %s111, 1
    %p115 = scmp.eq.s32.totalorder %s12, 2
    %p116 = scmp.ne.s32.totalorder %s111, %s113
    %p117 = scmp.eq.s32.totalorder %s12, 0
    %p118 = por %p116, %p117
    %p119 = scmp.ne.s32.totalorder %s111, %s113
    %p120 = scmp.eq.s32.totalorder %s17, 2
    %p121 = por %p119, %p120
    %p122 = scmp.ne.s32.totalorder %s113, %s114
    %p123 = scmp.eq.s32.totalorder %s17, 0
    %p124 = por %p122, %p123
    %p125 = scmp.ne.s32.totalorder %s113, %s114
    %p126 = scmp.eq.s32.totalorder %s18, 2
    %p127 = por %p125, %p126
    %p129 = scmp.ne.s32.totalorder %s114, %s128
    %p130 = scmp.eq.s32.totalorder %s18, 0
    %p131 = por %p129, %p130
    %s133 = sadd.s32 %s132, 1
    %p136 = scmp.eq.s32.totalorder %s12, 2
    %p137 = scmp.ne.s32.totalorder %s132, %s134
    %p138 = scmp.eq.s32.totalorder %s12, 0
    %p139 = por %p137, %p138
    %p140 = scmp.ne.s32.totalorder %s132, %s134
    %p141 = scmp.eq.s32.totalorder %s17, 2
    %p142 = por %p140, %p141
    %p143 = scmp.ne.s32.totalorder %s134, %s135
    %p144 = scmp.eq.s32.totalorder %s17, 0
    %p145 = por %p143, %p144
    %p146 = scmp.ne.s32.totalorder %s134, %s135
    %p147 = scmp.eq.s32.totalorder %s18, 2
    %p148 = por %p146, %p147
    %p150 = scmp.ne.s32.totalorder %s135, %s149
    %p151 = scmp.eq.s32.totalorder %s18, 0
    %p152 = por %p150, %p151
    %s154 = sadd.s32 %s153, 1
    %p157 = scmp.eq.s32.totalorder %s12, 2
    %p158 = scmp.ne.s32.totalorder %s153, %s155
    %p159 = scmp.eq.s32.totalorder %s12, 0
    %p160 = por %p158, %p159
    %p161 = scmp.ne.s32.totalorder %s153, %s155
    %p162 = scmp.eq.s32.totalorder %s17, 2
    %p163 = por %p161, %p162
    %p164 = scmp.ne.s32.totalorder %s155, %s156
    %p165 = scmp.eq.s32.totalorder %s17, 0
    %p166 = por %p164, %p165
    %p167 = scmp.ne.s32.totalorder %s155, %s156
    %p168 = scmp.eq.s32.totalorder %s18, 2
    %p169 = por %p167, %p168
    %p171 = scmp.ne.s32.totalorder %s156, %s170
    %p172 = scmp.eq.s32.totalorder %s18, 0
    %p173 = por %p171, %p172
    %s174 = ssub.s32 %s19, %s31
    %s175 = ssub.s32 %s20, %s27
    %s176 = sor.u32 %s174, %s175
    %p177 = scmp.eq.s32.totalorder %s176, 0
    %s179 = sadd.s32 %s178, 1
    %s180 = scalar_select %p177, %s178, %s179
    %p183 = pneg %p177
    %p184 = scmp.eq.s32.totalorder %s12, 2
    %p185 = por %p183, %p184
    %p186 = scmp.ne.s32.totalorder %s178, %s181
    %p187 = scmp.eq.s32.totalorder %s12, 0
    %p188 = por %p186, %p187
    %p189 = scmp.ne.s32.totalorder %s178, %s181
    %p190 = scmp.eq.s32.totalorder %s17, 2
    %p191 = por %p189, %p190
    %p192 = scmp.ne.s32.totalorder %s181, %s182
    %p193 = scmp.eq.s32.totalorder %s17, 0
    %p194 = por %p192, %p193
    %p195 = scmp.ne.s32.totalorder %s181, %s182
    %p196 = scmp.eq.s32.totalorder %s18, 2
    %p197 = por %p195, %p196
    %p199 = scmp.ne.s32.totalorder %s182, %s198
    %p200 = scmp.eq.s32.totalorder %s18, 0
    %p201 = por %p199, %p200
    %p202 = scmp.le.s32.totalorder 1, %s12
    %p203 = scmp.lt.s32.totalorder %s12, 4
    %p204 = pnand %p202, %p203
    %p205 = pneg %p204
    // Predicated region
    $region9: #{tpu_custom_call.1} parent=5 // pred_check
      _
    $region10: #{tpu_custom_call.1} parent=5 // pred_check_branch
      %207 = sbr.rel (%p204) target = $region12
    $region11: #{tpu_custom_call.1} parent=5 // pred_region
      %s208 = ssub.s32 %s12, 1
      // Predicated region
      $region13: #{tpu_custom_call.1} parent=11 // pred_check
        %p209 = pneg %p103
      $region14: #{tpu_custom_call.1} parent=11 // pred_check_branch
        %211 = sbr.rel (%p209) target = $region16
      $region15: #{tpu_custom_call.1} parent=11 // pred_region
        _
      $region16: #{tpu_custom_call.1} parent=11 // pred_fallthru
        _
      // Predicated region
      $region17: #{tpu_custom_call.1} parent=11 // pred_check
        %p212 = pneg %p124
      $region18: #{tpu_custom_call.1} parent=11 // pred_check_branch
        %214 = sbr.rel (%p212) target = $region20
      $region19: #{tpu_custom_call.1} parent=11 // pred_region
        _
      $region20: #{tpu_custom_call.1} parent=11 // pred_fallthru
        _
      // Predicated region
      $region21: #{tpu_custom_call.1} parent=11 // pred_check
        %p215 = pneg %p145
      $region22: #{tpu_custom_call.1} parent=11 // pred_check_branch
        %217 = sbr.rel (%p215) target = $region24
      $region23: #{tpu_custom_call.1} parent=11 // pred_region
        _
      $region24: #{tpu_custom_call.1} parent=11 // pred_fallthru
        _
      // Predicated region
      $region25: #{tpu_custom_call.1} parent=11 // pred_check
        %p218 = pneg %p166
      $region26: #{tpu_custom_call.1} parent=11 // pred_check_branch
        %220 = sbr.rel (%p218) target = $region28
      $region27: #{tpu_custom_call.1} parent=11 // pred_region
        _
      $region28: #{tpu_custom_call.1} parent=11 // pred_fallthru
        _
    $region12: #{tpu_custom_call.1} parent=5 // pred_fallthru
      _
    %p221 = scmp.lt.s32.totalorder %s12, 3
    // Predicated region
    $region29: #{tpu_custom_call.1} parent=5 // pred_check
      %p222 = pneg %p221
    $region30: #{tpu_custom_call.1} parent=5 // pred_check_branch
      %224 = sbr.rel (%p222) target = $region32
    $region31: #{tpu_custom_call.1} parent=5 // pred_region
      // Predicated region
      $region33: #{tpu_custom_call.1} parent=31 // pred_check
        %p225 = pneg %p46
      $region34: #{tpu_custom_call.1} parent=31 // pred_check_branch
        %227 = sbr.rel (%p225) target = $region36
      $region35: #{tpu_custom_call.1} parent=31 // pred_region
        %p228 = scmp.lt.s32.totalorder %s19, 0
        %s229 = scalar_select %p228, %s19, 0
        %p230 = scmp.lt.s32.totalorder %s20, 3
        %s231 = scalar_select %p230, %s20, 3
        %s232 = smul.addr %s229, 4
        %s233 = sadd.s32 %s231, %s232
        %s234 = smul.addr %s233, 4
        %s235 = scalar_lea.vmem %s0, %s234
      $region36: #{tpu_custom_call.1} parent=31 // pred_fallthru
        _
      // Predicated region
      $region37: #{tpu_custom_call.1} parent=31 // pred_check
        %p236 = pneg %p76
      $region38: #{tpu_custom_call.1} parent=31 // pred_check_branch
        %238 = sbr.rel (%p236) target = $region40
      $region39: #{tpu_custom_call.1} parent=31 // pred_region
        %s239 = sadd.s32 %s20, 1
        %p240 = scmp.lt.s32.totalorder %s19, 0
        %s241 = scalar_select %p240, %s19, 0
        %p242 = scmp.lt.s32.totalorder %s239, 3
        %s243 = scalar_select %p242, %s239, 3
        %s244 = smul.addr %s241, 4
        %s245 = sadd.s32 %s243, %s244
        %s246 = smul.addr %s245, 4
        %s247 = scalar_lea.vmem %s1, %s246
        %s248 = sadd.s32 %s20, 1
      $region40: #{tpu_custom_call.1} parent=31 // pred_fallthru
        _
    $region32: #{tpu_custom_call.1} parent=5 // pred_fallthru
      _
    %p249 = scmp.le.s32.totalorder 1, %s12
    %p250 = scmp.lt.s32.totalorder %s12, 4
    %p251 = pnand %p249, %p250
    %p252 = pneg %p251
    // Predicated region
    $region41: #{tpu_custom_call.1} parent=5 // pred_check
      _
    $region42: #{tpu_custom_call.1} parent=5 // pred_check_branch
      %254 = sbr.rel (%p251) target = $region44
    $region43: #{tpu_custom_call.1} parent=5 // pred_region
      %s255 = ssub.s32 %s12, 1
      %p256 = scmp.lt.s32.totalorder %s21, 0
      %s257 = scalar_select %p256, %s21, 0
      %p258 = scmp.lt.s32.totalorder %s22, 3
      %s259 = scalar_select %p258, %s22, 3
      %s260 = smul.addr %s257, 4
      %s261 = sadd.s32 %s259, %s260
      %s262 = smul.addr %s261, 4
      %s263 = scalar_lea.vmem %s0, %s262
      %p264 = pneg %p52
      %p265 = pneg %p49
      %s266 = sadd.s32 %s22, 1
      %p267 = scmp.lt.s32.totalorder %s21, 0
      %s268 = scalar_select %p267, %s21, 0
      %p269 = scmp.lt.s32.totalorder %s266, 3
      %s270 = scalar_select %p269, %s266, 3
      %s271 = smul.addr %s268, 4
      %s272 = sadd.s32 %s270, %s271
      %s273 = smul.addr %s272, 4
      %s274 = scalar_lea.vmem %s1, %s273
      %p275 = pneg %p82
      %p276 = pneg %p79
      %p277 = pneg %p103
      %p278 = pneg %p100
      %p279 = pneg %p124
      %p280 = pneg %p121
      %p281 = pneg %p145
      %p282 = pneg %p142
      %p283 = pneg %p166
      %p284 = pneg %p163
      %p285 = pneg %p194
      %p286 = pneg %p191
      %p287 = scmp.lt.s32.totalorder %s21, 0
      %s288 = scalar_select %p287, %s21, 0
      %p289 = scmp.lt.s32.totalorder %s22, 2
      %s290 = scalar_select %p289, %s22, 2
      %s291 = smul.addr %s288, 3
      %s292 = sadd.s32 %s290, %s291
      %s293 = smul.addr %s292, 8
      %s294 = scalar_lea.vmem %s6, %s293
      %p295 = scmp.lt.s32.totalorder %s21, 0
      %s296 = scalar_select %p295, %s21, 0
      %p297 = scmp.lt.s32.totalorder %s22, 3
      %s298 = scalar_select %p297, %s22, 3
      %s299 = smul.addr %s296, 4
      %s300 = sadd.s32 %s298, %s299
      %s301 = smul.addr %s300, 4
      %s302 = scalar_lea.vmem %s0, %s301
      %s303 = sadd.s32 %s22, 1
      %p304 = scmp.lt.s32.totalorder %s21, 0
      %s305 = scalar_select %p304, %s21, 0
      %p306 = scmp.lt.s32.totalorder %s303, 3
      %s307 = scalar_select %p306, %s303, 3
      %s308 = smul.addr %s305, 4
      %s309 = sadd.s32 %s307, %s308
      %s310 = smul.addr %s309, 4
      %s311 = scalar_lea.vmem %s1, %s310
      %s312 = sadd.s32 %s22, 1
      %p313 = scmp.lt.s32.totalorder %s21, 0
      %s314 = scalar_select %p313, %s21, 0
      %p315 = scmp.lt.s32.totalorder %s22, 2
      %s316 = scalar_select %p315, %s22, 2
      %s317 = smul.addr %s314, 3
      %s318 = sadd.s32 %s316, %s317
      %s319 = smul.addr %s318, 8
      %s320 = scalar_lea.vmem %s6, %s319
      %v322 = vld [vmem:[%s302] sm:$0xf]
      %v323 = vld [vmem:[%s311] sm:$0xf]
      %v326 = vrot.slane %v322, 4
      %v327 = vrot.slane %v323, 4
      %328 = vrot.lane.b32.xlu0 %v326, 127
      %v329 = vpop.permute.xlu0 %328
      %330 = vrot.lane.b32.xlu0 %v327, 127
      %v331 = vpop.permute.xlu0 %330
      %vm332 = vcmask 1039360
      %v333 = vsel %vm332, %v329, %v331
      %334 = vrot.lane.b32.xlu0 %v322, 126
      %v335 = vpop.permute.xlu0 %334
      %336 = vrot.lane.b32.xlu0 %v323, 126
      %v337 = vpop.permute.xlu0 %336
      %vm338 = vcmask 1031168
      %v339 = vsel %vm338, %v335, %v337
      %340 = vrot.lane.b32.xlu0 %v326, 110
      %v341 = vpop.permute.xlu0 %340
      %342 = vrot.lane.b32.xlu0 %v327, 110
      %v343 = vpop.permute.xlu0 %342
      %vm344 = vcmask 900096
      %v345 = vsel %vm344, %v341, %v343
      %346 = vrot.lane.b32.xlu0 %v322, 109
      %v347 = vpop.permute.xlu0 %346
      %348 = vrot.lane.b32.xlu0 %v323, 109
      %v349 = vpop.permute.xlu0 %348
      %vm350 = vcmask 891904
      %v351 = vsel %vm350, %v347, %v349
      %352 = vrot.lane.b32.xlu0 %v326, 108
      %v353 = vpop.permute.xlu0 %352
      %354 = vrot.lane.b32.xlu0 %v327, 108
      %v355 = vpop.permute.xlu0 %354
      %vm356 = vcmask 883712
      %v357 = vsel %vm356, %v353, %v355
      %358 = vrot.lane.b32.xlu0 %v322, 92
      %v359 = vpop.permute.xlu0 %358
      %360 = vrot.lane.b32.xlu0 %v323, 92
      %v361 = vpop.permute.xlu0 %360
      %vm362 = vcmask 752640
      %v363 = vsel %vm362, %v359, %v361
      %364 = vrot.lane.b32.xlu0 %v326, 91
      %v365 = vpop.permute.xlu0 %364
      %366 = vrot.lane.b32.xlu0 %v327, 91
      %v367 = vpop.permute.xlu0 %366
      %vm368 = vcmask 744448
      %v369 = vsel %vm368, %v365, %v367
      %370 = vrot.lane.b32.xlu0 %v322, 90
      %v371 = vpop.permute.xlu0 %370
      %372 = vrot.lane.b32.xlu0 %v323, 90
      %v373 = vpop.permute.xlu0 %372
      %vm374 = vcmask 736256
      %v375 = vsel %vm374, %v371, %v373
      %vm376 = vcmask 1043456
      %v379 = vsel %vm376, %v322, %v333
      %v383 = vsel %vm376, %v339, %v345
      %v387 = vsel %vm376, %v351, %v357
      %v391 = vsel %vm376, %v363, %v369
      %v393 = vld [vmem:[%s2] sm:$0xf]
      %v394 = vld [vmem:[%s2 + $0x4] sm:$0xf]
      %v395 = vld [vmem:[%s2 + $0x8] sm:$0xf]
      %v396 = vld [vmem:[%s2 + $0xc] sm:$0xf]
      %v397 = vld [vmem:[%s2 + $0x10] sm:$0xf]
      %v398 = vld [vmem:[%s2 + $0x14] sm:$0xf]
      %v399 = vld [vmem:[%s2 + $0x18] sm:$0xf]
      %v400 = vld [vmem:[%s2 + $0x1c] sm:$0xf]
      %v401 = vld [vmem:[%s2 + $0x20] sm:$0xf]
      %v402 = vld [vmem:[%s2 + $0x24] sm:$0xf]
      %v403 = vld [vmem:[%s2 + $0x28] sm:$0xf]
      %v404 = vld [vmem:[%s2 + $0x2c] sm:$0xf]
      %v405 = vld [vmem:[%s2 + $0x30] sm:$0xf]
      %v406 = vld [vmem:[%s2 + $0x34] sm:$0xf]
      %v407 = vld [vmem:[%s2 + $0x38] sm:$0xf]
      %v408 = vld [vmem:[%s2 + $0x3c] sm:$0xf]
      %v409 = vld [vmem:[%s3] sm:$0xff]
      %v410 = vld [vmem:[%s3 + $0x8] sm:$0xff]
      %v411 = vld [vmem:[%s3 + $0x10] sm:$0xff]
      %v412 = vld [vmem:[%s3 + $0x18] sm:$0xff]
      %v413 = vld [vmem:[%s3 + $0x20] sm:$0xff]
      %v414 = vld [vmem:[%s3 + $0x28] sm:$0xff]
      %v415 = vld [vmem:[%s3 + $0x30] sm:$0xff]
      %v416 = vld [vmem:[%s3 + $0x38] sm:$0xff]
      %v417 = vld [vmem:[%s3 + $0x40] sm:$0xff]
      %v418 = vld [vmem:[%s3 + $0x48] sm:$0xff]
      %v419 = vld [vmem:[%s3 + $0x50] sm:$0xff]
      %v420 = vld [vmem:[%s3 + $0x58] sm:$0xff]
      %v421 = vld [vmem:[%s3 + $0x60] sm:$0xff]
      %v422 = vld [vmem:[%s3 + $0x68] sm:$0xff]
      %v423 = vld [vmem:[%s3 + $0x70] sm:$0xff]
      %v424 = vld [vmem:[%s3 + $0x78] sm:$0xff]
      %426 = vset.pattern.permute.xlu0 0
      %427 = vperm.xlu0 %426, %v409
      %v428 = vpop.permute.xlu0 %427
      %431 = vset.pattern.permute.xlu0 0
      %432 = vperm.xlu0 %431, %v410
      %v433 = vpop.permute.xlu0 %432
      %436 = vset.pattern.permute.xlu0 0
      %437 = vperm.xlu0 %436, %v411
      %v438 = vpop.permute.xlu0 %437
      %441 = vset.pattern.permute.xlu0 0
      %442 = vperm.xlu0 %441, %v412
      %v443 = vpop.permute.xlu0 %442
      %446 = vset.pattern.permute.xlu0 0
      %447 = vperm.xlu0 %446, %v413
      %v448 = vpop.permute.xlu0 %447
      %451 = vset.pattern.permute.xlu0 0
      %452 = vperm.xlu0 %451, %v414
      %v453 = vpop.permute.xlu0 %452
      %456 = vset.pattern.permute.xlu0 0
      %457 = vperm.xlu0 %456, %v415
      %v458 = vpop.permute.xlu0 %457
      %461 = vset.pattern.permute.xlu0 0
      %462 = vperm.xlu0 %461, %v416
      %v463 = vpop.permute.xlu0 %462
      %466 = vset.pattern.permute.xlu0 0
      %467 = vperm.xlu0 %466, %v417
      %v468 = vpop.permute.xlu0 %467
      %471 = vset.pattern.permute.xlu0 0
      %472 = vperm.xlu0 %471, %v418
      %v473 = vpop.permute.xlu0 %472
      %476 = vset.pattern.permute.xlu0 0
      %477 = vperm.xlu0 %476, %v419
      %v478 = vpop.permute.xlu0 %477
      %481 = vset.pattern.permute.xlu0 0
      %482 = vperm.xlu0 %481, %v420
      %v483 = vpop.permute.xlu0 %482
      %486 = vset.pattern.permute.xlu0 0
      %487 = vperm.xlu0 %486, %v421
      %v488 = vpop.permute.xlu0 %487
      %491 = vset.pattern.permute.xlu0 0
      %492 = vperm.xlu0 %491, %v422
      %v493 = vpop.permute.xlu0 %492
      %496 = vset.pattern.permute.xlu0 0
      %497 = vperm.xlu0 %496, %v423
      %v498 = vpop.permute.xlu0 %497
      %501 = vset.pattern.permute.xlu0 0
      %502 = vperm.xlu0 %501, %v424
      %v503 = vpop.permute.xlu0 %502
      %v521 = vunpack.c.l.b16 %v393
      %v522 = vunpack.c.l.b16 %v394
      %v523 = vunpack.c.l.b16 %v395
      %v524 = vunpack.c.l.b16 %v396
      %v525 = vunpack.c.l.b16 %v397
      %v526 = vunpack.c.l.b16 %v398
      %v527 = vunpack.c.l.b16 %v399
      %v528 = vunpack.c.l.b16 %v400
      %v529 = vunpack.c.l.b16 %v401
      %v530 = vunpack.c.l.b16 %v402
      %v531 = vunpack.c.l.b16 %v403
      %v532 = vunpack.c.l.b16 %v404
      %v533 = vunpack.c.l.b16 %v405
      %v534 = vunpack.c.l.b16 %v406
      %v535 = vunpack.c.l.b16 %v407
      %v536 = vunpack.c.l.b16 %v408
      %v537 = vpack.c.b16 %v522, %v521
      %v538 = vpack.c.b16 %v524, %v523
      %v539 = vpack.c.b16 %v526, %v525
      %v540 = vpack.c.b16 %v528, %v527
      %v541 = vpack.c.b16 %v530, %v529
      %v542 = vpack.c.b16 %v532, %v531
      %v543 = vpack.c.b16 %v534, %v533
      %v544 = vpack.c.b16 %v536, %v535
      %vm545 = vcmask 588800
      %v547 = vsel %vm545, %v537, 0
      %v550 = vsel %vm545, %v538, 0
      %v553 = vsel %vm545, %v539, 0
      %v556 = vsel %vm545, %v540, 0
      %v559 = vsel %vm545, %v541, 0
      %v562 = vsel %vm545, %v542, 0
      %v565 = vsel %vm545, %v543, 0
      %v568 = vsel %vm545, %v544, 0
      %v571 = vsel %vm376, %v375, 0
      %573 = vmatprep.subr.bf16.mxu0 0
      %574 = vmatpush1.bf16.msra.mxu0 0
      %575 = vmatprep.subr.bf16.mxu0 0
      %576 = vmatpush1.bf16.msra.mxu0 0
      %577 = vmatprep.subr.bf16.mxu0 0
      %578 = vmatpush1.bf16.msra.mxu0 0
      %579 = vmatprep.subr.bf16.mxu0 0
      %580 = vmatpush1.bf16.msra.mxu0 %v571
      %581 = vmatprep.subr.bf16.mxu0 0
      %582 = vmatpush1.bf16.msra.mxu0 %v391
      %583 = vmatprep.subr.bf16.mxu0 0
      %584 = vmatpush1.bf16.msra.mxu0 %v387
      %585 = vmatprep.subr.bf16.mxu0 0
      %586 = vmatpush1.bf16.msra.mxu0 %v383
      %587 = vmatprep.subr.bf16.mxu0 0
      %588 = vmatpush1.bf16.msra.mxu0 %v379
      %589 = vmatprep.subr.bf16.mxu0 0
      %590 = vmatpush2.bf16.msra.mxu0 0
      %591 = vmatprep.subr.bf16.mxu0 0
      %592 = vmatpush2.bf16.msra.mxu0 0
      %593 = vmatprep.subr.bf16.mxu0 0
      %594 = vmatpush2.bf16.msra.mxu0 0
      %595 = vmatprep.subr.bf16.mxu0 0
      %596 = vmatpush2.bf16.msra.mxu0 0
      %597 = vmatprep.subr.bf16.mxu0 0
      %598 = vmatpush2.bf16.msra.mxu0 0
      %599 = vmatprep.subr.bf16.mxu0 0
      %600 = vmatpush2.bf16.msra.mxu0 0
      %601 = vmatprep.subr.bf16.mxu0 0
      %602 = vmatpush2.bf16.msra.mxu0 0
      %603 = vmatprep.subr.bf16.mxu0 0
      %604 = vmatpush2.bf16.msra.mxu0 0
      %605 = vmatprep.mubr.bf16.mxu0 0
      %606 = vmatmul.mubr.bf16.gmra.mxu0 %v547
      %v607 = vpop.f32.mrf.mxu0
      %v608 = vadd.f32 %v428, %v607
      %v609 = vpop.f32.mrf.mxu0
      %v610 = vpop.f32.mrf.mxu0
      %v611 = vadd.f32 %v433, %v610
      %v612 = vpop.f32.mrf.mxu0
      %613 = vmatprep.mubr.bf16.mxu0 0
      %614 = vmatmul.mubr.bf16.gmra.mxu0 %v550
      %v615 = vpop.f32.mrf.mxu0
      %v616 = vadd.f32 %v438, %v615
      %v617 = vpop.f32.mrf.mxu0
      %v618 = vpop.f32.mrf.mxu0
      %v619 = vadd.f32 %v443, %v618
      %v620 = vpop.f32.mrf.mxu0
      %621 = vmatprep.mubr.bf16.mxu0 0
      %622 = vmatmul.mubr.bf16.gmra.mxu0 %v553
      %v623 = vpop.f32.mrf.mxu0
      %v624 = vadd.f32 %v448, %v623
      %v625 = vpop.f32.mrf.mxu0
      %v626 = vpop.f32.mrf.mxu0
      %v627 = vadd.f32 %v453, %v626
      %v628 = vpop.f32.mrf.mxu0
      %629 = vmatprep.mubr.bf16.mxu0 0
      %630 = vmatmul.mubr.bf16.gmra.mxu0 %v556
      %v631 = vpop.f32.mrf.mxu0
      %v632 = vadd.f32 %v458, %v631
      %v633 = vpop.f32.mrf.mxu0
      %v634 = vpop.f32.mrf.mxu0
      %v635 = vadd.f32 %v463, %v634
      %v636 = vpop.f32.mrf.mxu0
      %637 = vmatprep.mubr.bf16.mxu0 0
      %638 = vmatmul.mubr.bf16.gmra.mxu0 %v559
      %v639 = vpop.f32.mrf.mxu0
      %v640 = vadd.f32 %v468, %v639
      %v641 = vpop.f32.mrf.mxu0
      %v642 = vpop.f32.mrf.mxu0
      %v643 = vadd.f32 %v473, %v642
      %v644 = vpop.f32.mrf.mxu0
      %645 = vmatprep.mubr.bf16.mxu0 0
      %646 = vmatmul.mubr.bf16.gmra.mxu0 %v562
      %v647 = vpop.f32.mrf.mxu0
      %v648 = vadd.f32 %v478, %v647
      %v649 = vpop.f32.mrf.mxu0
      %v650 = vpop.f32.mrf.mxu0
      %v651 = vadd.f32 %v483, %v650
      %v652 = vpop.f32.mrf.mxu0
      %653 = vmatprep.mubr.bf16.mxu0 0
      %654 = vmatmul.mubr.bf16.gmra.mxu0 %v565
      %v655 = vpop.f32.mrf.mxu0
      %v656 = vadd.f32 %v488, %v655
      %v657 = vpop.f32.mrf.mxu0
      %v658 = vpop.f32.mrf.mxu0
      %v659 = vadd.f32 %v493, %v658
      %v660 = vpop.f32.mrf.mxu0
      %661 = vmatprep.mubr.bf16.mxu0 0
      %662 = vmatmul.mubr.bf16.gmra.mxu0 %v568
      %v663 = vpop.f32.mrf.mxu0
      %v664 = vadd.f32 %v498, %v663
      %v665 = vpop.f32.mrf.mxu0
      %v666 = vpop.f32.mrf.mxu0
      %v667 = vadd.f32 %v503, %v666
      %v668 = vpop.f32.mrf.mxu0
      %669 = vdwg.mxu0
      %v670 = vmax.f32 %v608, 0.0
      %v671 = vmax.f32 %v611, 0.0
      %v672 = vmax.f32 %v616, 0.0
      %v673 = vmax.f32 %v619, 0.0
      %v674 = vmax.f32 %v624, 0.0
      %v675 = vmax.f32 %v627, 0.0
      %v676 = vmax.f32 %v632, 0.0
      %v677 = vmax.f32 %v635, 0.0
      %v678 = vmax.f32 %v640, 0.0
      %v679 = vmax.f32 %v643, 0.0
      %v680 = vmax.f32 %v648, 0.0
      %v681 = vmax.f32 %v651, 0.0
      %v682 = vmax.f32 %v656, 0.0
      %v683 = vmax.f32 %v659, 0.0
      %v684 = vmax.f32 %v664, 0.0
      %v685 = vmax.f32 %v667, 0.0
      %v686 = vpack.c.bf16 %v671, %v670
      %v687 = vpack.c.bf16 %v673, %v672
      %v688 = vpack.c.bf16 %v675, %v674
      %v689 = vpack.c.bf16 %v677, %v676
      %v690 = vpack.c.bf16 %v679, %v678
      %v691 = vpack.c.bf16 %v681, %v680
      %v692 = vpack.c.bf16 %v683, %v682
      %v693 = vpack.c.bf16 %v685, %v684
      %v694 = vld [vmem:[%s4] sm:$0x7]
      %v695 = vld [vmem:[%s5] sm:$0x3f]
      %697 = vset.pattern.permute.xlu0 0
      %698 = vperm.xlu0 %697, %v695
      %v699 = vpop.permute.xlu0 %698
      %701 = vmatprep.subr.bf16.mxu0 0
      %702 = vmatpush1.bf16.msra.mxu0 %v693
      %703 = vmatprep.subr.bf16.mxu0 0
      %704 = vmatpush1.bf16.msra.mxu0 %v692
      %705 = vmatprep.subr.bf16.mxu0 0
      %706 = vmatpush1.bf16.msra.mxu0 %v691
      %707 = vmatprep.subr.bf16.mxu0 0
      %708 = vmatpush1.bf16.msra.mxu0 %v690
      %709 = vmatprep.subr.bf16.mxu0 0
      %710 = vmatpush1.bf16.msra.mxu0 %v689
      %711 = vmatprep.subr.bf16.mxu0 0
      %712 = vmatpush1.bf16.msra.mxu0 %v688
      %713 = vmatprep.subr.bf16.mxu0 0
      %714 = vmatpush1.bf16.msra.mxu0 %v687
      %715 = vmatprep.subr.bf16.mxu0 0
      %716 = vmatpush1.bf16.msra.mxu0 %v686
      %717 = vmatprep.subr.bf16.mxu0 0
      %718 = vmatpush2.bf16.msra.mxu0 0
      %719 = vmatprep.subr.bf16.mxu0 0
      %720 = vmatpush2.bf16.msra.mxu0 0
      %721 = vmatprep.subr.bf16.mxu0 0
      %722 = vmatpush2.bf16.msra.mxu0 0
      %723 = vmatprep.subr.bf16.mxu0 0
      %724 = vmatpush2.bf16.msra.mxu0 0
      %725 = vmatprep.subr.bf16.mxu0 0
      %726 = vmatpush2.bf16.msra.mxu0 0
      %727 = vmatprep.subr.bf16.mxu0 0
      %728 = vmatpush2.bf16.msra.mxu0 0
      %729 = vmatprep.subr.bf16.mxu0 0
      %730 = vmatpush2.bf16.msra.mxu0 0
      %731 = vmatprep.subr.bf16.mxu0 0
      %732 = vmatpush2.bf16.msra.mxu0 0
      %733 = vmatprep.mubr.bf16.mxu0 0
      %734 = vmatmul.mubr.bf16.gmra.mxu0 %v694
      %v735 = vpop.f32.mrf.mxu0
      %v736 = vadd.f32 %v699, %v735
      %v737 = vpop.f32.mrf.mxu0
      %v738 = vpop.f32.mrf.mxu0
      %v739 = vpop.f32.mrf.mxu0
      %740 = vdwg.mxu0
      %741 = vst [vmem:[%s320] sm:$0x3f] %v736
      %p742 = scmp.lt.s32.totalorder %s21, 0
      %s743 = scalar_select %p742, %s21, 0
      %p744 = scmp.lt.s32.totalorder %s22, 2
      %s745 = scalar_select %p744, %s22, 2
      %s746 = smul.addr %s743, 3
      %s747 = sadd.s32 %s745, %s746
      %s748 = smul.addr %s747, 8
      %s749 = scalar_lea.vmem %s6, %s748
      // Predicated region
      $region45: #{tpu_custom_call.1} parent=43 // pred_check
        %p750 = pneg %p191
      $region46: #{tpu_custom_call.1} parent=43 // pred_check_branch
        %752 = sbr.rel (%p750) target = $region48
      $region47: #{tpu_custom_call.1} parent=43 // pred_region
        _
      $region48: #{tpu_custom_call.1} parent=43 // pred_fallthru
        _
    $region44: #{tpu_custom_call.1} parent=5 // pred_fallthru
      _
    %p753 = scmp.le.s32.totalorder 2, %s12
    // Predicated region
    $region49: #{tpu_custom_call.1} parent=5 // pred_check
      %p754 = pneg %p753
    $region50: #{tpu_custom_call.1} parent=5 // pred_check_branch
      %756 = sbr.rel (%p754) target = $region52
    $region51: #{tpu_custom_call.1} parent=5 // pred_region
      %s757 = ssub.s32 %s12, 2
      // Predicated region
      $region53: #{tpu_custom_call.1} parent=51 // pred_check
        %p758 = pneg %p197
      $region54: #{tpu_custom_call.1} parent=51 // pred_check_branch
        %760 = sbr.rel (%p758) target = $region56
      $region55: #{tpu_custom_call.1} parent=51 // pred_region
        %p761 = scmp.lt.s32.totalorder %s23, 0
        %s762 = scalar_select %p761, %s23, 0
        %p763 = scmp.lt.s32.totalorder %s24, 2
        %s764 = scalar_select %p763, %s24, 2
        %s765 = smul.addr %s762, 3
        %s766 = sadd.s32 %s764, %s765
        %s767 = smul.addr %s766, 8
        %s768 = scalar_lea.vmem %s6, %s767
      $region56: #{tpu_custom_call.1} parent=51 // pred_fallthru
        _
    $region52: #{tpu_custom_call.1} parent=5 // pred_fallthru
      _
  $region6: #{tpu_custom_call.1} parent=0 // loop_footer
    %s16 = sadd.s32 1, %s12
  $region7: #{tpu_custom_call.1} parent=0 // loop_footer_branch
    %11 = sbr.rel target = $region3
  $region8: #{tpu_custom_call.1} parent=0 // loop_exit
    _

</llo_original>
